<compile_context>
chip_gen: v7x
topology: tpu7x:2x2x1
jax: 0.10.0
libtpu: 0.0.40
codegen_flags: <defaults>
</compile_context>

<pallas_src>
import jax
import jax.numpy as jnp
from jax.experimental import pallas as pl
from jax.experimental.pallas import tpu as pltpu

N_TOKENS = 21  # vocab size of the masked-token head


def _proj_kernel(w_ref, b_ref, x_ref, o_ref):
    # w_ref: (21, K)  b_ref: (21, 1)  x_ref: (tm, K)  o_ref: (21, tm)
    acc = jax.lax.dot_general(
        w_ref[...], x_ref[...],
        dimension_numbers=(((1,), (1,)), ((), ())),   # contract K with K
        preferred_element_type=jnp.float32,
    )
    o_ref[...] = (acc + b_ref[...]).astype(o_ref.dtype)


def _choose_tm(nl, target):
    """Pick a lane-dense row tile: full NL if it fits, else a multiple of 128."""
    if nl <= target:
        return nl                       # block == full dim, always legal
    return max(128, (target // 128) * 128)


def masked_token_network(x, weight, bias, *, tm=None, tm_target=8192):
    """x: (B, N, L, n_feat) -> logits: (B, 21, N*L)

    weight: (21, n_feat)  (PyTorch nn.Linear layout, used as-is)
    bias:   (21,)
    """
    B, N, L, K = x.shape
    NL = N * L
    assert weight.shape == (N_TOKENS, K), weight.shape
    assert bias.shape == (N_TOKENS,), bias.shape

    if tm is None:
        tm = _choose_tm(NL, tm_target)

    x3d = x.reshape(B, NL, K)            # contiguous reshape (free)
    b2d = bias.reshape(N_TOKENS, 1)      # broadcasts over the lane (tm) axis

    grid = (B, pl.cdiv(NL, tm))

    itemsize = x.dtype.itemsize
    cost = pl.CostEstimate(
        flops=2 * B * NL * K * N_TOKENS,
        transcendentals=0,
        bytes_accessed=(B * NL * K * itemsize            # activations
                        + N_TOKENS * K * itemsize        # weight
                        + N_TOKENS * itemsize            # bias
                        + B * N_TOKENS * NL * itemsize), # logits
    )

    logits = pl.pallas_call(
        _proj_kernel,
        out_shape=jax.ShapeDtypeStruct((B, N_TOKENS, NL), x.dtype),
        grid_spec=pltpu.PrefetchScalarGridSpec(
            num_scalar_prefetch=0,
            grid=grid,
            in_specs=[
                pl.BlockSpec((N_TOKENS, K), lambda b, j: (0, 0)),   # weight, resident
                pl.BlockSpec((N_TOKENS, 1), lambda b, j: (0, 0)),   # bias, resident
                pl.BlockSpec((None, tm, K), lambda b, j: (b, j, 0)),  # activations
            ],
            out_specs=pl.BlockSpec((None, N_TOKENS, tm), lambda b, j: (b, 0, j)),
        ),
        compiler_params=pltpu.CompilerParams(
            dimension_semantics=("parallel", "parallel"),
        ),
        cost_estimate=cost,
    )(weight, b2d, x3d)

    return logits


if __name__ == "__main__":
    key = jax.random.PRNGKey(0)
    k0, k1, k2 = jax.random.split(key, 3)

    # Case 1: the module as specified (zero-initialized head), small shapes.
    B, N, L, n_feat = 2, 8, 8, 32
    x = jax.random.normal(k0, (B, N, L, n_feat), dtype=jnp.float32)
    w0 = jnp.zeros((N_TOKENS, n_feat), dtype=jnp.float32)
    b0 = jnp.zeros((N_TOKENS,), dtype=jnp.float32)

    logits = jax.block_until_ready(masked_token_network(x, w0, b0))
    assert logits.shape == (B, N_TOKENS, N * L), logits.shape
    assert bool(jnp.all(logits == 0.0))  # zero-initialized head -> zero logits

    # Case 2: nonzero params, NL not divisible by tm (exercises the tail tile)
    # and checks against a pure-JAX reference of the PyTorch forward.
    B2, N2, L2 = 2, 8, 40  # NL = 320, tm forced to 128 -> partial last block
    x2 = jax.random.normal(k1, (B2, N2, L2, n_feat), dtype=jnp.float32)
    w = 0.02 * jax.random.normal(k2, (N_TOKENS, n_feat), dtype=jnp.float32)
    b = jnp.arange(N_TOKENS, dtype=jnp.float32) * 0.01

    got = jax.block_until_ready(masked_token_network(x2, w, b, tm=128))
    ref = (jnp.einsum("bnlk,tk->btnl", x2, w).reshape(B2, N_TOKENS, N2 * L2)
           + b[None, :, None])
    assert got.shape == ref.shape, (got.shape, ref.shape)
    assert jnp.allclose(got, ref, atol=1e-4, rtol=1e-4), \
        float(jnp.max(jnp.abs(got - ref)))

    print("KERNEL_OK")
</pallas_src>

<mosaic_0001>
module attributes {stable_mosaic.version = 11 : i64} {
  func.func @_proj_kernel(%arg0: i32, %arg1: i32, %arg2: memref<21x32xf32, #tpu.memory_space<vmem>>, %arg3: memref<21x1xf32, #tpu.memory_space<vmem>>, %arg4: memref<1x64x32xf32, #tpu.memory_space<vmem>>, %arg5: memref<1x21x64xf32, #tpu.memory_space<vmem>>) attributes {dimension_semantics = [#tpu.dimension_semantics<parallel>, #tpu.dimension_semantics<parallel>], iteration_bounds = array<i64: 2, 1>, scalar_prefetch = 0 : i64, scratch_operands = 0 : i64, tpu.core_type = #tpu.core_type<tc>, window_params = [{pipeline_mode = #tpu.pipeline_mode<synchronous>, transform_indices = @transform_0, window_bounds = array<i64: 21, 32>}, {pipeline_mode = #tpu.pipeline_mode<synchronous>, transform_indices = @transform_1, window_bounds = array<i64: 21, 1>}, {transform_indices = @transform_2, window_bounds = array<i64: 1, 64, 32>}, {transform_indices = @transform_3, window_bounds = array<i64: 1, 21, 64>}]} {
    %c0 = arith.constant 0 : index
    %c0_0 = arith.constant 0 : index
    %0 = vector.load %arg2[%c0, %c0_0] : memref<21x32xf32, #tpu.memory_space<vmem>>, vector<21x32xf32>
    %c0_1 = arith.constant 0 : index
    %c0_2 = arith.constant 0 : index
    %c0_3 = arith.constant 0 : index
    %1 = vector.load %arg4[%c0_1, %c0_2, %c0_3] : memref<1x64x32xf32, #tpu.memory_space<vmem>>, vector<1x64x32xf32>
    %2 = vector.shape_cast %1 : vector<1x64x32xf32> to vector<64x32xf32>
    %cst = arith.constant dense<0.000000e+00> : vector<21x64xf32>
    %3 = tpu.matmul %0, %2, %cst {dimension_numbers = #tpu.dot_dimension_numbers<[1], [1], [0], [0], [0, 0, 1, 0], [], []>} : vector<21x32xf32>, vector<64x32xf32>, vector<21x64xf32> -> vector<21x64xf32>
    %c0_4 = arith.constant 0 : index
    %c0_5 = arith.constant 0 : index
    %4 = vector.load %arg3[%c0_4, %c0_5] : memref<21x1xf32, #tpu.memory_space<vmem>>, vector<21x1xf32>
    %5 = vector.broadcast %4 : vector<21x1xf32> to vector<21x64xf32>
    %6 = arith.addf %3, %5 : vector<21x64xf32>
    %c0_6 = arith.constant 0 : index
    %c0_7 = arith.constant 0 : index
    %c0_8 = arith.constant 0 : index
    %7 = vector.load %arg5[%c0_6, %c0_7, %c0_8] : memref<1x21x64xf32, #tpu.memory_space<vmem>>, vector<1x21x64xf32>
    %8 = vector.shape_cast %7 : vector<1x21x64xf32> to vector<21x64xf32>
    %9 = vector.shape_cast %6 : vector<21x64xf32> to vector<1x21x64xf32>
    tpu.vector_store %arg5[%c0_6, %c0_7, %c0_8], %9 {strides = array<i32>} : memref<1x21x64xf32, #tpu.memory_space<vmem>>, vector<1x21x64xf32>,
    return
  }
  func.func @transform_0(%arg0: i32, %arg1: i32) -> (i32, i32) {
    %c0_i32 = arith.constant 0 : i32
    %c0_i32_0 = arith.constant 0 : i32
    %c0_i32_1 = arith.constant 0 : i32
    return %c0_i32, %c0_i32_0 : i32, i32
  }
  func.func @transform_1(%arg0: i32, %arg1: i32) -> (i32, i32) {
    %c0_i32 = arith.constant 0 : i32
    %c0_i32_0 = arith.constant 0 : i32
    %c0_i32_1 = arith.constant 0 : i32
    return %c0_i32, %c0_i32_0 : i32, i32
  }
  func.func @transform_2(%arg0: i32, %arg1: i32) -> (i32, i32, i32) {
    %c0_i32 = arith.constant 0 : i32
    %c0_i32_0 = arith.constant 0 : i32
    return %arg0, %arg1, %c0_i32 : i32, i32, i32
  }
  func.func @transform_3(%arg0: i32, %arg1: i32) -> (i32, i32, i32) {
    %c0_i32 = arith.constant 0 : i32
    %c0_i32_0 = arith.constant 0 : i32
    return %arg0, %c0_i32, %arg1 : i32, i32, i32
  }
}

</mosaic_0001>

<llo_original>
// kernel: tpu_custom_call.1
$region0: #{tpu_custom_call.1}
  #allocation0 [shape = 'u32[]', space=smem, size = 0x4, offset = 0x4, fixed_abs, tag = 'smem constant byte address 0x4 - core index']
  #allocation1 [shape = 'u32[144,128]{1,0:T(1,128)}', space=vmem, size = 0x12000, scoped, tag = 'internal scratch']
  %s0 = inlined_call_operand.vmem [shape: f32[21,32], index: 0, kind: input, shape index: {}]
  %s1 = inlined_call_operand.vmem [shape: f32[21,1], index: 1, kind: input, shape index: {}]
  %s2 = inlined_call_operand.vmem [shape: f32[2,64,32], index: 2, kind: input, shape index: {}]
  %s3 = inlined_call_operand.vmem [shape: f32[2,21,64], index: 3, kind: output, shape index: {}]
  %s4 = sld [smem:[#allocation0]]
  $region45: #{tpu_custom_call.1} parent=0
    _
  %s6 = ssub.s32 1, %s4
  %s7 = scalar_select 0, %s6, %s4
  loop: start=0, step=1, limit=4
  $region2: #{tpu_custom_call.1} parent=0 // loop_pre_header
    _
  $region3: #{tpu_custom_call.1} parent=0 // loop_header
    %s9 = sphi 0, %s13
    %p10 = scmp.ge.s32.totalorder %s9, 4
    %s16 = sphi 0, %s28
    %s17 = sphi 0, %s24
    %s18 = sphi 0, %s16
    %s19 = sphi 0, %s17
    %s20 = sphi 0, %s18
    %s21 = sphi 0, %s19
    %s29 = sphi 0, %s29
    %s31 = sphi 0, %s29
    %s32 = sphi 0, %s31
    %s46 = sphi 0, %s32
    %s50 = sphi 0, %s50
    %s52 = sphi 0, %s50
    %s53 = sphi 0, %s52
    %s67 = sphi 0, %s53
    %s75 = sphi 0, %s77
    %s78 = sphi 0, %s75
    %s79 = sphi 0, %s78
    %s95 = sphi 0, %s79
    %s103 = sphi 0, %s105
    %s106 = sphi 0, %s103
    %s107 = sphi 0, %s106
    %s123 = sphi 0, %s107
  $region4: #{tpu_custom_call.1} parent=0 // loop_header_branch
    %12 = sbr.rel (%p10) target = $region8
  $region5: #{tpu_custom_call.1} parent=0 // loop_body
    %s14 = ssub.s32 %s9, 1
    %s15 = ssub.s32 %s9, 2
    %s22 = sadd.s32 1, %s17
    %p23 = scmp.ge.s32.totalorder %s22, 1
    %s24 = scalar_select %p23, 0, %s22
    %s25 = sadd.s32 1, %s16
    %s26 = scalar_select %p23, %s25, %s16
    %p27 = scmp.ge.s32.totalorder %s26, 2
    %s28 = scalar_select %p27, 0, %s26
    %s30 = sadd.s32 %s29, 1
    %p33 = scmp.eq.s32.totalorder %s9, 1
    %p34 = scmp.ne.s32.totalorder %s29, %s31
    %p35 = scmp.eq.s32.totalorder %s9, 0
    %p36 = por %p34, %p35
    %p37 = scmp.ne.s32.totalorder %s29, %s31
    %p38 = scmp.eq.s32.totalorder %s14, 1
    %p39 = por %p37, %p38
    %p40 = scmp.ne.s32.totalorder %s31, %s32
    %p41 = scmp.eq.s32.totalorder %s14, 0
    %p42 = por %p40, %p41
    %p43 = scmp.ne.s32.totalorder %s31, %s32
    %p44 = scmp.eq.s32.totalorder %s15, 1
    %p45 = por %p43, %p44
    %p47 = scmp.ne.s32.totalorder %s32, %s46
    %p48 = scmp.eq.s32.totalorder %s15, 0
    %p49 = por %p47, %p48
    %s51 = sadd.s32 %s50, 1
    %p54 = scmp.eq.s32.totalorder %s9, 1
    %p55 = scmp.ne.s32.totalorder %s50, %s52
    %p56 = scmp.eq.s32.totalorder %s9, 0
    %p57 = por %p55, %p56
    %p58 = scmp.ne.s32.totalorder %s50, %s52
    %p59 = scmp.eq.s32.totalorder %s14, 1
    %p60 = por %p58, %p59
    %p61 = scmp.ne.s32.totalorder %s52, %s53
    %p62 = scmp.eq.s32.totalorder %s14, 0
    %p63 = por %p61, %p62
    %p64 = scmp.ne.s32.totalorder %s52, %s53
    %p65 = scmp.eq.s32.totalorder %s15, 1
    %p66 = por %p64, %p65
    %p68 = scmp.ne.s32.totalorder %s53, %s67
    %p69 = scmp.eq.s32.totalorder %s15, 0
    %p70 = por %p68, %p69
    %s71 = ssub.s32 %s16, %s28
    %s72 = ssub.s32 %s17, %s24
    %s73 = sor.u32 %s71, %s72
    %p74 = scmp.eq.s32.totalorder %s73, 0
    %s76 = sadd.s32 %s75, 1
    %s77 = scalar_select %p74, %s75, %s76
    %p80 = pneg %p74
    %p81 = scmp.eq.s32.totalorder %s9, 1
    %p82 = por %p80, %p81
    %p83 = scmp.ne.s32.totalorder %s75, %s78
    %p84 = scmp.eq.s32.totalorder %s9, 0
    %p85 = por %p83, %p84
    %p86 = scmp.ne.s32.totalorder %s75, %s78
    %p87 = scmp.eq.s32.totalorder %s14, 1
    %p88 = por %p86, %p87
    %p89 = scmp.ne.s32.totalorder %s78, %s79
    %p90 = scmp.eq.s32.totalorder %s14, 0
    %p91 = por %p89, %p90
    %p92 = scmp.ne.s32.totalorder %s78, %s79
    %p93 = scmp.eq.s32.totalorder %s15, 1
    %p94 = por %p92, %p93
    %p96 = scmp.ne.s32.totalorder %s79, %s95
    %p97 = scmp.eq.s32.totalorder %s15, 0
    %p98 = por %p96, %p97
    %s99 = ssub.s32 %s16, %s28
    %s100 = ssub.s32 %s17, %s24
    %s101 = sor.u32 %s99, %s100
    %p102 = scmp.eq.s32.totalorder %s101, 0
    %s104 = sadd.s32 %s103, 1
    %s105 = scalar_select %p102, %s103, %s104
    %p108 = pneg %p102
    %p109 = scmp.eq.s32.totalorder %s9, 1
    %p110 = por %p108, %p109
    %p111 = scmp.ne.s32.totalorder %s103, %s106
    %p112 = scmp.eq.s32.totalorder %s9, 0
    %p113 = por %p111, %p112
    %p114 = scmp.ne.s32.totalorder %s103, %s106
    %p115 = scmp.eq.s32.totalorder %s14, 1
    %p116 = por %p114, %p115
    %p117 = scmp.ne.s32.totalorder %s106, %s107
    %p118 = scmp.eq.s32.totalorder %s14, 0
    %p119 = por %p117, %p118
    %p120 = scmp.ne.s32.totalorder %s106, %s107
    %p121 = scmp.eq.s32.totalorder %s15, 1
    %p122 = por %p120, %p121
    %p124 = scmp.ne.s32.totalorder %s107, %s123
    %p125 = scmp.eq.s32.totalorder %s15, 0
    %p126 = por %p124, %p125
    %p127 = scmp.le.s32.totalorder 1, %s9
    %p128 = scmp.lt.s32.totalorder %s9, 3
    %p129 = pnand %p127, %p128
    %p130 = pneg %p129
    // Predicated region
    $region9: #{tpu_custom_call.1} parent=5 // pred_check
      _
    $region10: #{tpu_custom_call.1} parent=5 // pred_check_branch
      %132 = sbr.rel (%p129) target = $region12
    $region11: #{tpu_custom_call.1} parent=5 // pred_region
      %s133 = ssub.s32 %s9, 1
      // Predicated region
      $region13: #{tpu_custom_call.1} parent=11 // pred_check
        %p134 = pneg %p42
      $region14: #{tpu_custom_call.1} parent=11 // pred_check_branch
        %136 = sbr.rel (%p134) target = $region16
      $region15: #{tpu_custom_call.1} parent=11 // pred_region
        _
      $region16: #{tpu_custom_call.1} parent=11 // pred_fallthru
        _
      // Predicated region
      $region17: #{tpu_custom_call.1} parent=11 // pred_check
        %p137 = pneg %p63
      $region18: #{tpu_custom_call.1} parent=11 // pred_check_branch
        %139 = sbr.rel (%p137) target = $region20
      $region19: #{tpu_custom_call.1} parent=11 // pred_region
        _
      $region20: #{tpu_custom_call.1} parent=11 // pred_fallthru
        _
    $region12: #{tpu_custom_call.1} parent=5 // pred_fallthru
      _
    %p140 = scmp.lt.s32.totalorder %s9, 2
    // Predicated region
    $region21: #{tpu_custom_call.1} parent=5 // pred_check
      %p141 = pneg %p140
    $region22: #{tpu_custom_call.1} parent=5 // pred_check_branch
      %143 = sbr.rel (%p141) target = $region24
    $region23: #{tpu_custom_call.1} parent=5 // pred_region
      // Predicated region
      $region25: #{tpu_custom_call.1} parent=23 // pred_check
        %p144 = pneg %p85
      $region26: #{tpu_custom_call.1} parent=23 // pred_check_branch
        %146 = sbr.rel (%p144) target = $region28
      $region27: #{tpu_custom_call.1} parent=23 // pred_region
        %s147 = smul.u32 8, %s17
        %p148 = scmp.lt.s32.totalorder %s16, 1
        %s149 = scalar_select %p148, %s16, 1
        %p150 = scmp.lt.s32.totalorder %s147, 7
        %s151 = scalar_select %p150, %s147, 7
        %s152 = smul.addr %s149, 8
        %s153 = sadd.s32 %s151, %s152
        %s154 = smul.addr %s153, 8
        %s155 = scalar_lea.vmem %s2, %s154
        %s156 = smul.u32 8, %s17
      $region28: #{tpu_custom_call.1} parent=23 // pred_fallthru
        _
    $region24: #{tpu_custom_call.1} parent=5 // pred_fallthru
      _
    %p157 = scmp.le.s32.totalorder 1, %s9
    %p158 = scmp.lt.s32.totalorder %s9, 3
    %p159 = pnand %p157, %p158
    %p160 = pneg %p159
    // Predicated region
    $region29: #{tpu_custom_call.1} parent=5 // pred_check
      _
    $region30: #{tpu_custom_call.1} parent=5 // pred_check_branch
      %162 = sbr.rel (%p159) target = $region32
    $region31: #{tpu_custom_call.1} parent=5 // pred_region
      %s163 = ssub.s32 %s9, 1
      %p164 = pneg %p42
      %p165 = pneg %p39
      %p166 = pneg %p63
      %p167 = pneg %p60
      %s168 = smul.u32 8, %s19
      %p169 = scmp.lt.s32.totalorder %s18, 1
      %s170 = scalar_select %p169, %s18, 1
      %p171 = scmp.lt.s32.totalorder %s168, 7
      %s172 = scalar_select %p171, %s168, 7
      %s173 = smul.addr %s170, 8
      %s174 = sadd.s32 %s172, %s173
      %s175 = smul.addr %s174, 8
      %s176 = scalar_lea.vmem %s2, %s175
      %p177 = pneg %p91
      %p178 = pneg %p88
      %p179 = pneg %p119
      %p180 = pneg %p116
      %p181 = scmp.lt.s32.totalorder %s18, 1
      %s182 = scalar_select %p181, %s18, 1
      %p183 = scmp.lt.s32.totalorder %s19, 0
      %s184 = scalar_select %p183, %s19, 0
      %s185 = smul.addr %s182, 3
      %s186 = sadd.s32 %s184, %s185
      %s187 = smul.addr %s186, 8
      %s188 = scalar_lea.vmem %s3, %s187
      %s189 = smul.u32 8, %s19
      %p190 = scmp.lt.s32.totalorder %s18, 1
      %s191 = scalar_select %p190, %s18, 1
      %p192 = scmp.lt.s32.totalorder %s189, 7
      %s193 = scalar_select %p192, %s189, 7
      %s194 = smul.addr %s191, 8
      %s195 = sadd.s32 %s193, %s194
      %s196 = smul.addr %s195, 8
      %s197 = scalar_lea.vmem %s2, %s196
      %s198 = smul.u32 8, %s19
      %p199 = scmp.lt.s32.totalorder %s18, 1
      %s200 = scalar_select %p199, %s18, 1
      %p201 = scmp.lt.s32.totalorder %s19, 0
      %s202 = scalar_select %p201, %s19, 0
      %s203 = smul.addr %s200, 3
      %s204 = sadd.s32 %s202, %s203
      %s205 = smul.addr %s204, 8
      %s206 = scalar_lea.vmem %s3, %s205
      %v207 = vld [vmem:[%s0] sm:$0xff]
      %v208 = vld [vmem:[%s0 + $0x8] sm:$0xff]
      %v209 = vld [vmem:[%s0 + $0x10] sm:$0x1f]
      %v210 = vld [vmem:[%s197] sm:$0xff]
      %v211 = vld [vmem:[%s197 + $0x8] sm:$0xff]
      %v212 = vld [vmem:[%s197 + $0x10] sm:$0xff]
      %v213 = vld [vmem:[%s197 + $0x18] sm:$0xff]
      %v214 = vld [vmem:[%s197 + $0x20] sm:$0xff]
      %v215 = vld [vmem:[%s197 + $0x28] sm:$0xff]
      %v216 = vld [vmem:[%s197 + $0x30] sm:$0xff]
      %v217 = vld [vmem:[%s197 + $0x38] sm:$0xff]
      %v218 = vld [vmem:[%s1] sm:$0xff]
      %v219 = vld [vmem:[%s1 + $0x8] sm:$0xff]
      %v220 = vld [vmem:[%s1 + $0x10] sm:$0x1f]
      %222 = vset.pattern.permute.xlu0 0
      %223 = vperm.xlu0 %222, %v218
      %v224 = vpop.permute.xlu0 %223
      %227 = vset.pattern.permute.xlu0 0
      %228 = vperm.xlu0 %227, %v219
      %v229 = vpop.permute.xlu0 %228
      %232 = vset.pattern.permute.xlu0 0
      %233 = vperm.xlu0 %232, %v220
      %v234 = vpop.permute.xlu0 %233
      %vm236 = vcmask 261120
      %v238 = vsel %vm236, %v207, 0
      %v241 = vsel %vm236, %v208, 0
      %v244 = vsel %vm236, %v209, 0
      %v247 = vsel %vm236, %v210, 0
      %v250 = vsel %vm236, %v211, 0
      %v253 = vsel %vm236, %v212, 0
      %v256 = vsel %vm236, %v213, 0
      %v259 = vsel %vm236, %v214, 0
      %v262 = vsel %vm236, %v215, 0
      %v265 = vsel %vm236, %v216, 0
      %v268 = vsel %vm236, %v217, 0
      %270 = vmatprep.subr.mxu0 0.0
      %271 = vmatpush1.xpose.msra.mxu0 %v247
      %272 = vmatprep.subr.mxu0 0.0
      %273 = vmatpush1.xpose.msra.mxu0 %v250
      %274 = vmatprep.subr.mxu0 0.0
      %275 = vmatpush1.xpose.msra.mxu0 %v253
      %276 = vmatprep.subr.mxu0 0.0
      %277 = vmatpush1.xpose.msra.mxu0 %v256
      %278 = vmatprep.subr.mxu0 0.0
      %279 = vmatpush1.xpose.msra.mxu0 %v259
      %280 = vmatprep.subr.mxu0 0.0
      %281 = vmatpush1.xpose.msra.mxu0 %v262
      %282 = vmatprep.subr.mxu0 0.0
      %283 = vmatpush1.xpose.msra.mxu0 %v265
      %284 = vmatprep.subr.mxu0 0.0
      %285 = vmatpush1.xpose.msra.mxu0 %v268
      %286 = vmatprep.subr.mxu0 0.0
      %287 = vmatpush1.xpose.msra.mxu0 0.0
      %288 = vmatprep.subr.mxu0 0.0
      %289 = vmatpush1.xpose.msra.mxu0 0.0
      %290 = vmatprep.subr.mxu0 0.0
      %291 = vmatpush1.xpose.msra.mxu0 0.0
      %292 = vmatprep.subr.mxu0 0.0
      %293 = vmatpush1.xpose.msra.mxu0 0.0
      %294 = vmatprep.subr.mxu0 0.0
      %295 = vmatpush1.xpose.msra.mxu0 0.0
      %296 = vmatprep.subr.mxu0 0.0
      %297 = vmatpush1.xpose.msra.mxu0 0.0
      %298 = vmatprep.subr.mxu0 0.0
      %299 = vmatpush1.xpose.msra.mxu0 0.0
      %300 = vmatprep.subr.mxu0 0.0
      %301 = vmatpush1.xpose.msra.mxu0 0.0
      %302 = vmatprep.subr.mxu0 0.0
      %303 = vmatpush1.xpose.msra.mxu0 0.0
      %304 = vmatprep.subr.mxu0 0.0
      %305 = vmatpush1.xpose.msra.mxu0 0.0
      %306 = vmatprep.subr.mxu0 0.0
      %307 = vmatpush1.xpose.msra.mxu0 0.0
      %308 = vmatprep.subr.mxu0 0.0
      %309 = vmatpush1.xpose.msra.mxu0 0.0
      %310 = vmatprep.subr.mxu0 0.0
      %311 = vmatpush1.xpose.msra.mxu0 0.0
      %312 = vmatprep.subr.mxu0 0.0
      %313 = vmatpush1.xpose.msra.mxu0 0.0
      %314 = vmatprep.subr.mxu0 0.0
      %315 = vmatpush1.xpose.msra.mxu0 0.0
      %316 = vmatprep.subr.mxu0 0.0
      %317 = vmatpush1.xpose.msra.mxu0 0.0
      %318 = vmatprep.subr.mxu0 0.0
      %319 = vmatpush1.xpose.msra.mxu0 0.0
      %320 = vmatprep.subr.mxu0 0.0
      %321 = vmatpush1.xpose.msra.mxu0 0.0
      %322 = vmatprep.subr.mxu0 0.0
      %323 = vmatpush1.xpose.msra.mxu0 0.0
      %324 = vmatprep.subr.mxu0 0.0
      %325 = vmatpush1.xpose.msra.mxu0 0.0
      %326 = vmatprep.subr.mxu0 0.0
      %327 = vmatpush1.xpose.msra.mxu0 0.0
      %328 = vmatprep.subr.mxu0 0.0
      %329 = vmatpush1.xpose.msra.mxu0 0.0
      %330 = vmatprep.subr.mxu0 0.0
      %331 = vmatpush1.xpose.msra.mxu0 0.0
      %332 = vmatprep.subr.mxu0 0.0
      %333 = vmatpush1.xpose.msra.mxu0 0.0
      %334 = vmatprep.mubr.f32.mxu0 0.0
      %335 = vmatmul.mubr.f32.gmra.mrb[0].mxu0 %v238
      %v336 = vpop.f32.mrb[0].mxu0
      %v337 = vadd.f32 %v224, %v336
      %v338 = vpop.f32.mrb[0].mxu0
      %339 = vmatprep.mubr.f32.mxu0 0.0
      %340 = vmatmul.mubr.f32.gmra.mrb[0].mxu0 %v241
      %v341 = vpop.f32.mrb[0].mxu0
      %v342 = vadd.f32 %v229, %v341
      %v343 = vpop.f32.mrb[0].mxu0
      %344 = vmatprep.mubr.f32.mxu0 0.0
      %345 = vmatmul.mubr.f32.gmra.mrb[0].mxu0 %v244
      %v346 = vpop.f32.mrb[0].mxu0
      %v347 = vadd.f32 %v234, %v346
      %v348 = vpop.f32.mrb[0].mxu0
      %349 = vdwg.mxu0
      %vm350 = vcmask 523264
      %351 = vst.msk [vmem:[%s206] sm:$0xff] %vm350, %v337
      %352 = vst.msk [vmem:[%s206 + $0x8] sm:$0xff] %vm350, %v342
      %vm353 = vcmask 520192
      %354 = vst.msk [vmem:[%s206 + $0x10] sm:$0x1f] %vm353, %v347
      %p355 = scmp.lt.s32.totalorder %s18, 1
      %s356 = scalar_select %p355, %s18, 1
      %p357 = scmp.lt.s32.totalorder %s19, 0
      %s358 = scalar_select %p357, %s19, 0
      %s359 = smul.addr %s356, 3
      %s360 = sadd.s32 %s358, %s359
      %s361 = smul.addr %s360, 8
      %s362 = scalar_lea.vmem %s3, %s361
      // Predicated region
      $region33: #{tpu_custom_call.1} parent=31 // pred_check
        %p363 = pneg %p116
      $region34: #{tpu_custom_call.1} parent=31 // pred_check_branch
        %365 = sbr.rel (%p363) target = $region36
      $region35: #{tpu_custom_call.1} parent=31 // pred_region
        _
      $region36: #{tpu_custom_call.1} parent=31 // pred_fallthru
        _
    $region32: #{tpu_custom_call.1} parent=5 // pred_fallthru
      _
    %p366 = scmp.le.s32.totalorder 2, %s9
    // Predicated region
    $region37: #{tpu_custom_call.1} parent=5 // pred_check
      %p367 = pneg %p366
    $region38: #{tpu_custom_call.1} parent=5 // pred_check_branch
      %369 = sbr.rel (%p367) target = $region40
    $region39: #{tpu_custom_call.1} parent=5 // pred_region
      %s370 = ssub.s32 %s9, 2
      // Predicated region
      $region41: #{tpu_custom_call.1} parent=39 // pred_check
        %p371 = pneg %p122
      $region42: #{tpu_custom_call.1} parent=39 // pred_check_branch
        %373 = sbr.rel (%p371) target = $region44
      $region43: #{tpu_custom_call.1} parent=39 // pred_region
        %p374 = scmp.lt.s32.totalorder %s20, 1
        %s375 = scalar_select %p374, %s20, 1
        %p376 = scmp.lt.s32.totalorder %s21, 0
        %s377 = scalar_select %p376, %s21, 0
        %s378 = smul.addr %s375, 3
        %s379 = sadd.s32 %s377, %s378
        %s380 = smul.addr %s379, 8
        %s381 = scalar_lea.vmem %s3, %s380
      $region44: #{tpu_custom_call.1} parent=39 // pred_fallthru
        _
    $region40: #{tpu_custom_call.1} parent=5 // pred_fallthru
      _
  $region6: #{tpu_custom_call.1} parent=0 // loop_footer
    %s13 = sadd.s32 1, %s9
  $region7: #{tpu_custom_call.1} parent=0 // loop_footer_branch
    %8 = sbr.rel target = $region3
  $region8: #{tpu_custom_call.1} parent=0 // loop_exit
    _

</llo_original>
